<compile_context>
chip_gen: v5e
topology: v5e:2x2
jax: 0.10.0
libtpu: 0.0.40
codegen_flags: <defaults>
</compile_context>

<pallas_src>
import functools

import jax
import jax.numpy as jnp
from jax import lax
from jax.experimental import pallas as pl
from jax.experimental.pallas import tpu as pltpu

LANES = 128
CHUNK_ROWS = 32           # inner accumulation chunk: (32, 128) per step
MAX_ROW_BLOCK = 2048      # (2048, 128) f32 = 1 MiB per input per pipeline buffer
ROW_ALIGN = 32            # satisfies f32 (8,128), bf16 (16,128), int8 (32,128) tiling
SINGLE_BLOCK_MAX_ROWS = 256   # below this, use the fully fused single-block kernel


def _cdiv(a, b):
    return -(-a // b)


def _round_up(x, m):
    return _cdiv(x, m) * m


def _accumulate(reg_out_ref, reg_tgt_ref, cls_out_ref, cls_tgt_ref, mask_ref,
                *, row_block, use_rmse, unroll):
    """Stream the (row_block, 128) VMEM tiles in (CHUNK_ROWS, 128) chunks and
    return three (8, 128) f32 partial sums: masked regression loss, masked BCE,
    and the mask count. Chunked in-vreg accumulation avoids materializing
    whole-block intermediates in VMEM (keeps the vst slot quiet)."""
    nchunks = row_block // CHUNK_ROWS

    def fold8(v):
        # (chunk, 128) -> (8, 128) via static sublane-aligned slices + VPU adds.
        acc = v[0:8]
        for r in range(8, v.shape[0], 8):
            acc = acc + v[r:r + 8]
        return acc

    def chunk_sums(read):
        sel = read(mask_ref) != 0                       # mask is pre-zero-padded
        d = read(reg_out_ref).astype(jnp.float32) - read(reg_tgt_ref).astype(jnp.float32)
        if use_rmse:
            reg_e = d * d                               # squared error; sqrt(mean) later
        else:
            ad = jnp.abs(d)                             # smooth L1, beta = 1.0
            reg_e = jnp.where(ad < 1.0, 0.5 * d * d, ad - 0.5)
        x = read(cls_out_ref).astype(jnp.float32)
        z = read(cls_tgt_ref).astype(jnp.float32)
        bce = jnp.maximum(x, 0.0) - x * z + jnp.log1p(jnp.exp(-jnp.abs(x)))
        zeros = jnp.zeros_like(d)
        return (fold8(jnp.where(sel, reg_e, zeros)),
                fold8(jnp.where(sel, bce, zeros)),
                fold8(sel.astype(jnp.float32)))

    if nchunks == 1:
        return chunk_sums(lambda ref: ref[...])

    def body(c, carry):
        reg_acc, bce_acc, cnt_acc = carry
        r0 = pl.multiple_of(c * CHUNK_ROWS, CHUNK_ROWS)
        reg_s, bce_s, cnt_s = chunk_sums(lambda ref: ref[pl.ds(r0, CHUNK_ROWS), :])
        return reg_acc + reg_s, bce_acc + bce_s, cnt_acc + cnt_s

    zeros8 = jnp.zeros((8, LANES), jnp.float32)
    return lax.fori_loop(0, nchunks, body, (zeros8, zeros8, zeros8), unroll=unroll)


def _partials_kernel(reg_out_ref, reg_tgt_ref, cls_out_ref, cls_tgt_ref, mask_ref,
                     out_ref, *, row_block, use_rmse, unroll):
    """Multi-block kernel: emits an (8,128) lane-parallel partial per quantity."""
    reg_acc, bce_acc, cnt_acc = _accumulate(
        reg_out_ref, reg_tgt_ref, cls_out_ref, cls_tgt_ref, mask_ref,
        row_block=row_block, use_rmse=use_rmse, unroll=unroll)
    out_ref[0, 0] = reg_acc
    out_ref[0, 1] = bce_acc
    out_ref[0, 2] = cnt_acc


def _fused_kernel(reg_out_ref, reg_tgt_ref, cls_out_ref, cls_tgt_ref, mask_ref,
                  out_ref, *, row_block, use_rmse, unroll, alpha):
    """Single-block kernel: finishes the reduction + masked mean + combination
    in-kernel and writes (combined, regression, classification) to SMEM."""
    reg_acc, bce_acc, cnt_acc = _accumulate(
        reg_out_ref, reg_tgt_ref, cls_out_ref, cls_tgt_ref, mask_ref,
        row_block=row_block, use_rmse=use_rmse, unroll=unroll)
    reg_sum = jnp.sum(reg_acc)
    bce_sum = jnp.sum(bce_acc)
    cnt = jnp.sum(cnt_acc)
    inv = jnp.where(cnt > 0.0, 1.0 / jnp.maximum(cnt, 1.0), 0.0)  # mask.sum()<=0 -> 0.0
    reg_loss = reg_sum * inv
    if use_rmse:
        reg_loss = jnp.sqrt(reg_loss)
    cls_loss = bce_sum * inv
    out_ref[0] = alpha * reg_loss + (1.0 - alpha) * cls_loss
    out_ref[1] = reg_loss
    out_ref[2] = cls_loss


def combination_loss(regression_output, regression_target,
                     classification_output, classification_target, mask,
                     *, alpha=0.9, regression_loss_type="smooth_l1"):
    """Returns (combined_loss, regression_loss, classification_loss) as f32 scalars."""
    if not 0.0 <= alpha <= 1.0:
        raise ValueError("alpha must be between 0 and 1.")
    if regression_loss_type not in ("rmse", "smooth_l1"):
        raise ValueError("regression_loss_type must be either 'rmse' or 'smooth_l1'.")
    alpha = float(alpha)
    use_rmse = regression_loss_type == "rmse"

    def _prep_float(v):
        v = jnp.asarray(v)
        if v.dtype not in (jnp.float32, jnp.bfloat16, jnp.float16):
            v = v.astype(jnp.float32)
        return v.reshape(-1)

    reg_out = _prep_float(regression_output)
    reg_tgt = _prep_float(regression_target)
    cls_out = _prep_float(classification_output)
    cls_tgt = _prep_float(classification_target)

    # Mask: stream at native width for f32/i32/i8 (no conversion pass); bool is a
    # trivial 1B->1B cast to int8; everything else falls back to (m != 0) int8.
    m = jnp.asarray(mask).reshape(-1)
    if m.dtype == jnp.bool_:
        m = m.astype(jnp.int8)
    elif m.dtype not in (jnp.float32, jnp.int32, jnp.int8):
        m = (m != 0).astype(jnp.int8)

    n = reg_out.shape[0]
    for v in (reg_tgt, cls_out, cls_tgt, m):
        if v.shape[0] != n:
            raise ValueError("all inputs and the mask must have the same number of elements.")

    rows_needed = max(_cdiv(n, LANES), 1)
    if rows_needed <= SINGLE_BLOCK_MAX_ROWS:
        row_block = _round_up(rows_needed, ROW_ALIGN)
        num_blocks = 1
    else:
        # Keep >= 2 blocks so the "parallel" grid axis can be split across
        # v7x's two TensorCores; cap blocks at MAX_ROW_BLOCK rows.
        row_block = min(MAX_ROW_BLOCK, _round_up(_cdiv(rows_needed, 2), ROW_ALIGN))
        num_blocks = _cdiv(rows_needed, row_block)

    rows_f = row_block if num_blocks == 1 else rows_needed   # minimal float padding
    full_rows = num_blocks * row_block                       # mask is fully zero-padded

    def _tiles(v, rows):
        pad = rows * LANES - v.shape[0]
        if pad:
            v = jnp.pad(v, (0, pad))                         # zeros; only when needed
        return v.reshape(rows, LANES)

    reg_out2 = _tiles(reg_out, rows_f)
    reg_tgt2 = _tiles(reg_tgt, rows_f)
    cls_out2 = _tiles(cls_out, rows_f)
    cls_tgt2 = _tiles(cls_tgt, rows_f)
    m2 = _tiles(m, full_rows)   # zero pad covers lane tail AND partial last block

    nchunks = row_block // CHUNK_ROWS
    unroll = 4 if nchunks % 4 == 0 else (2 if nchunks % 2 == 0 else 1)

    if num_blocks == 1:
        # Small-N path: finish everything in-kernel, skip the XLA epilogue reduction.
        kernel = functools.partial(_fused_kernel, row_block=row_block,
                                   use_rmse=use_rmse, unroll=unroll, alpha=alpha)
        out = pl.pallas_call(
            kernel,
            out_shape=jax.ShapeDtypeStruct((3,), jnp.float32),
            grid=(1,),
            in_specs=[pl.BlockSpec((row_block, LANES), lambda i: (0, 0))] * 5,
            out_specs=pl.BlockSpec(memory_space=pltpu.MemorySpace.SMEM),
        )(reg_out2, reg_tgt2, cls_out2, cls_tgt2, m2)
        return out[0], out[1], out[2]

    kernel = functools.partial(_partials_kernel, row_block=row_block,
                               use_rmse=use_rmse, unroll=unroll)
    if num_blocks >= 3:
        data_spec = pl.BlockSpec((row_block, LANES), lambda i: (i, 0),
                                 pipeline_mode=pl.Buffered(3))
    else:
        data_spec = pl.BlockSpec((row_block, LANES), lambda i: (i, 0))
    bytes_accessed = (4 * 4 * rows_f * LANES
                      + m2.dtype.itemsize * full_rows * LANES
                      + num_blocks * 3 * 8 * LANES * 4)
    partials = pl.pallas_call(
        kernel,
        out_shape=jax.ShapeDtypeStruct((num_blocks, 3, 8, LANES), jnp.float32),
        grid=(num_blocks,),
        in_specs=[data_spec] * 5,
        out_specs=pl.BlockSpec((1, 3, 8, LANES), lambda i: (i, 0, 0, 0)),
        compiler_params=pltpu.CompilerParams(
            dimension_semantics=("parallel",),
            vmem_limit_bytes=32 * 1024 * 1024),
        cost_estimate=pl.CostEstimate(
            flops=20 * n, transcendentals=2 * n, bytes_accessed=int(bytes_accessed)),
    )(reg_out2, reg_tgt2, cls_out2, cls_tgt2, m2)

    # Tiny epilogue: cross-block/lane reduction, masked mean, alpha combination.
    sums = jnp.sum(partials, axis=(0, 2, 3))
    reg_sum, bce_sum, cnt = sums[0], sums[1], sums[2]
    inv = jnp.where(cnt > 0.0, 1.0 / jnp.maximum(cnt, 1.0), 0.0)
    reg_loss = reg_sum * inv
    if use_rmse:
        reg_loss = jnp.sqrt(reg_loss)
    cls_loss = bce_sum * inv
    combined = alpha * reg_loss + (1.0 - alpha) * cls_loss
    return combined, reg_loss, cls_loss


def _reference(reg_out, reg_tgt, cls_out, cls_tgt, mask, alpha=0.9,
               loss_type="smooth_l1"):
    """Pure-JAX reference mirroring the PyTorch module."""
    m = mask.astype(jnp.float32)
    cnt = m.sum()
    diff = reg_out - reg_tgt
    if loss_type == "rmse":
        reg_elem = diff * diff
    else:
        ad = jnp.abs(diff)
        reg_elem = jnp.where(ad < 1.0, 0.5 * diff * diff, ad - 0.5)
    x, z = cls_out, cls_tgt.astype(jnp.float32)
    bce = jnp.maximum(x, 0.0) - x * z + jnp.log1p(jnp.exp(-jnp.abs(x)))
    inv = jnp.where(cnt > 0, 1.0 / jnp.maximum(cnt, 1.0), 0.0)
    reg_loss = (m * reg_elem).sum() * inv
    if loss_type == "rmse":
        reg_loss = jnp.sqrt(reg_loss)
    cls_loss = (m * bce).sum() * inv
    return alpha * reg_loss + (1 - alpha) * cls_loss, reg_loss, cls_loss


if __name__ == "__main__":
    def make_inputs(n, key):
        k1, k2, k3, k4, k5 = jax.random.split(key, 5)
        reg_out = jax.random.normal(k1, (n,), jnp.float32)
        reg_tgt = jax.random.normal(k2, (n,), jnp.float32)
        cls_out = jax.random.normal(k3, (n,), jnp.float32)   # logits
        cls_tgt = (jax.random.uniform(k4, (n,)) > 0.5).astype(jnp.float32)
        mask = jax.random.uniform(k5, (n,)) > 0.3            # boolean mask
        return reg_out, reg_tgt, cls_out, cls_tgt, mask

    key = jax.random.PRNGKey(0)
    cases = [
        (2048, "bool"),       # single-block, fully fused in-kernel finish
        (33333, "float32"),   # 2-block path, ragged tail, f32 mask streamed natively
        (600000, "bool"),     # 3-block path (Buffered(3)), ragged tail
    ]
    for n, mdtype in cases:
        key, sub = jax.random.split(key)
        reg_out, reg_tgt, cls_out, cls_tgt, mask = make_inputs(n, sub)
        mask_in = mask if mdtype == "bool" else mask.astype(jnp.float32)
        for loss_type in ("smooth_l1", "rmse"):
            got = combination_loss(reg_out, reg_tgt, cls_out, cls_tgt, mask_in,
                                   alpha=0.9, regression_loss_type=loss_type)
            jax.block_until_ready(got)
            want = _reference(reg_out, reg_tgt, cls_out, cls_tgt, mask,
                              alpha=0.9, loss_type=loss_type)
            for g, w in zip(got, want):
                assert jnp.allclose(g, w, atol=1e-5, rtol=2e-4), (n, loss_type, g, w)

    # All-masked-out path must return zeros (mirrors the PyTorch early return).
    n = 2048
    reg_out, reg_tgt, cls_out, cls_tgt, _ = make_inputs(n, jax.random.PRNGKey(1))
    zero_mask = jnp.zeros((n,), dtype=bool)
    got0 = combination_loss(reg_out, reg_tgt, cls_out, cls_tgt, zero_mask)
    jax.block_until_ready(got0)
    assert all(jnp.allclose(g, 0.0) for g in got0), got0

    print("KERNEL_OK")
</pallas_src>

<mosaic_0001>
module attributes {stable_mosaic.version = 11 : i64} {
  func.func @_fused_kernel(%arg0: i32, %arg1: memref<32x128xf32, #tpu.memory_space<vmem>>, %arg2: memref<32x128xf32, #tpu.memory_space<vmem>>, %arg3: memref<32x128xf32, #tpu.memory_space<vmem>>, %arg4: memref<32x128xf32, #tpu.memory_space<vmem>>, %arg5: memref<32x128xi8, #tpu.memory_space<vmem>>, %arg6: memref<3xf32, #tpu.memory_space<smem>>) attributes {dimension_semantics = [#tpu.dimension_semantics<arbitrary>], iteration_bounds = array<i64: 1>, scalar_prefetch = 0 : i64, scratch_operands = 0 : i64, tpu.core_type = #tpu.core_type<tc>, window_params = [{pipeline_mode = #tpu.pipeline_mode<synchronous>, transform_indices = @transform_0, window_bounds = array<i64: 32, 128>}, {pipeline_mode = #tpu.pipeline_mode<synchronous>, transform_indices = @transform_1, window_bounds = array<i64: 32, 128>}, {pipeline_mode = #tpu.pipeline_mode<synchronous>, transform_indices = @transform_2, window_bounds = array<i64: 32, 128>}, {pipeline_mode = #tpu.pipeline_mode<synchronous>, transform_indices = @transform_3, window_bounds = array<i64: 32, 128>}, {pipeline_mode = #tpu.pipeline_mode<synchronous>, transform_indices = @transform_4, window_bounds = array<i64: 32, 128>}, {transform_indices = @transform_5, window_bounds = array<i64: 3>}]} {
    %c0 = arith.constant 0 : index
    %c0_0 = arith.constant 0 : index
    %0 = vector.load %arg5[%c0, %c0_0] : memref<32x128xi8, #tpu.memory_space<vmem>>, vector<32x128xi8>
    %c0_i8 = arith.constant 0 : i8
    %1 = vector.broadcast %c0_i8 : i8 to vector<32x128xi8>
    %2 = arith.cmpi ne, %0, %1 : vector<32x128xi8>
    %c0_1 = arith.constant 0 : index
    %c0_2 = arith.constant 0 : index
    %3 = vector.load %arg1[%c0_1, %c0_2] : memref<32x128xf32, #tpu.memory_space<vmem>>, vector<32x128xf32>
    %c0_3 = arith.constant 0 : index
    %c0_4 = arith.constant 0 : index
    %4 = vector.load %arg2[%c0_3, %c0_4] : memref<32x128xf32, #tpu.memory_space<vmem>>, vector<32x128xf32>
    %5 = arith.subf %3, %4 : vector<32x128xf32>
    %6 = math.absf %5 : vector<32x128xf32>
    %cst = arith.constant 1.000000e+00 : f32
    %7 = vector.broadcast %cst : f32 to vector<32x128xf32>
    %8 = arith.cmpf olt, %6, %7 : vector<32x128xf32>
    %cst_5 = arith.constant 5.000000e-01 : f32
    %9 = vector.broadcast %cst_5 : f32 to vector<32x128xf32>
    %10 = arith.mulf %9, %5 : vector<32x128xf32>
    %11 = arith.mulf %10, %5 : vector<32x128xf32>
    %cst_6 = arith.constant 5.000000e-01 : f32
    %12 = vector.broadcast %cst_6 : f32 to vector<32x128xf32>
    %13 = arith.subf %6, %12 : vector<32x128xf32>
    %14 = arith.select %8, %11, %13 : vector<32x128xi1>, vector<32x128xf32>
    %c0_7 = arith.constant 0 : index
    %c0_8 = arith.constant 0 : index
    %15 = vector.load %arg3[%c0_7, %c0_8] : memref<32x128xf32, #tpu.memory_space<vmem>>, vector<32x128xf32>
    %c0_9 = arith.constant 0 : index
    %c0_10 = arith.constant 0 : index
    %16 = vector.load %arg4[%c0_9, %c0_10] : memref<32x128xf32, #tpu.memory_space<vmem>>, vector<32x128xf32>
    %cst_11 = arith.constant 0.000000e+00 : f32
    %17 = vector.broadcast %cst_11 : f32 to vector<32x128xf32>
    %18 = arith.maximumf %15, %17 : vector<32x128xf32>
    %19 = arith.mulf %15, %16 : vector<32x128xf32>
    %20 = arith.subf %18, %19 : vector<32x128xf32>
    %21 = math.absf %15 : vector<32x128xf32>
    %cst_12 = arith.constant 0.000000e+00 : f32
    %22 = vector.broadcast %cst_12 : f32 to vector<32x128xf32>
    %23 = arith.subf %22, %21 : vector<32x128xf32>
    %24 = math.exp %23 : vector<32x128xf32>
    %25 = math.log1p %24 : vector<32x128xf32>
    %26 = arith.addf %20, %25 : vector<32x128xf32>
    %cst_13 = arith.constant 0.000000e+00 : f32
    %27 = vector.broadcast %cst_13 : f32 to vector<32x128xf32>
    %28 = arith.select %2, %14, %27 : vector<32x128xi1>, vector<32x128xf32>
    %29 = vector.extract_strided_slice %28 {offsets = [0, 0], sizes = [8, 128], strides = [1, 1]} : vector<32x128xf32> to vector<8x128xf32>
    %30 = vector.extract_strided_slice %28 {offsets = [8, 0], sizes = [8, 128], strides = [1, 1]} : vector<32x128xf32> to vector<8x128xf32>
    %31 = arith.addf %29, %30 : vector<8x128xf32>
    %32 = vector.extract_strided_slice %28 {offsets = [16, 0], sizes = [8, 128], strides = [1, 1]} : vector<32x128xf32> to vector<8x128xf32>
    %33 = arith.addf %31, %32 : vector<8x128xf32>
    %34 = vector.extract_strided_slice %28 {offsets = [24, 0], sizes = [8, 128], strides = [1, 1]} : vector<32x128xf32> to vector<8x128xf32>
    %35 = arith.addf %33, %34 : vector<8x128xf32>
    %36 = arith.select %2, %26, %27 : vector<32x128xi1>, vector<32x128xf32>
    %37 = vector.extract_strided_slice %36 {offsets = [0, 0], sizes = [8, 128], strides = [1, 1]} : vector<32x128xf32> to vector<8x128xf32>
    %38 = vector.extract_strided_slice %36 {offsets = [8, 0], sizes = [8, 128], strides = [1, 1]} : vector<32x128xf32> to vector<8x128xf32>
    %39 = arith.addf %37, %38 : vector<8x128xf32>
    %40 = vector.extract_strided_slice %36 {offsets = [16, 0], sizes = [8, 128], strides = [1, 1]} : vector<32x128xf32> to vector<8x128xf32>
    %41 = arith.addf %39, %40 : vector<8x128xf32>
    %42 = vector.extract_strided_slice %36 {offsets = [24, 0], sizes = [8, 128], strides = [1, 1]} : vector<32x128xf32> to vector<8x128xf32>
    %43 = arith.addf %41, %42 : vector<8x128xf32>
    %44 = arith.extui %2 : vector<32x128xi1> to vector<32x128xi32>
    %45 = arith.sitofp %44 : vector<32x128xi32> to vector<32x128xf32>
    %46 = vector.extract_strided_slice %45 {offsets = [0, 0], sizes = [8, 128], strides = [1, 1]} : vector<32x128xf32> to vector<8x128xf32>
    %47 = vector.extract_strided_slice %45 {offsets = [8, 0], sizes = [8, 128], strides = [1, 1]} : vector<32x128xf32> to vector<8x128xf32>
    %48 = arith.addf %46, %47 : vector<8x128xf32>
    %49 = vector.extract_strided_slice %45 {offsets = [16, 0], sizes = [8, 128], strides = [1, 1]} : vector<32x128xf32> to vector<8x128xf32>
    %50 = arith.addf %48, %49 : vector<8x128xf32>
    %51 = vector.extract_strided_slice %45 {offsets = [24, 0], sizes = [8, 128], strides = [1, 1]} : vector<32x128xf32> to vector<8x128xf32>
    %52 = arith.addf %50, %51 : vector<8x128xf32>
    %53 = vector.shape_cast %35 : vector<8x128xf32> to vector<1x8x128xf32>
    %cst_14 = arith.constant dense<0.000000e+00> : vector<1xf32>
    %54 = vector.multi_reduction <add>, %53, %cst_14 [1, 2] : vector<1x8x128xf32> to vector<1xf32>
    %55 = vector.shape_cast %54 : vector<1xf32> to vector<1x1x1xf32>
    %56 = vector.extract %55[0, 0, 0] : f32 from vector<1x1x1xf32>
    %57 = vector.shape_cast %43 : vector<8x128xf32> to vector<1x8x128xf32>
    %cst_15 = arith.constant dense<0.000000e+00> : vector<1xf32>
    %58 = vector.multi_reduction <add>, %57, %cst_15 [1, 2] : vector<1x8x128xf32> to vector<1xf32>
    %59 = vector.shape_cast %58 : vector<1xf32> to vector<1x1x1xf32>
    %60 = vector.extract %59[0, 0, 0] : f32 from vector<1x1x1xf32>
    %61 = vector.shape_cast %52 : vector<8x128xf32> to vector<1x8x128xf32>
    %cst_16 = arith.constant dense<0.000000e+00> : vector<1xf32>
    %62 = vector.multi_reduction <add>, %61, %cst_16 [1, 2] : vector<1x8x128xf32> to vector<1xf32>
    %63 = vector.shape_cast %62 : vector<1xf32> to vector<1x1x1xf32>
    %64 = vector.extract %63[0, 0, 0] : f32 from vector<1x1x1xf32>
    %cst_17 = arith.constant 0.000000e+00 : f32
    %65 = arith.cmpf ogt, %64, %cst_17 : f32
    %cst_18 = arith.constant 1.000000e+00 : f32
    %66 = arith.maximumf %64, %cst_18 : f32
    %cst_19 = arith.constant 1.000000e+00 : f32
    %67 = arith.divf %cst_19, %66 : f32
    %cst_20 = arith.constant 0.000000e+00 : f32
    %68 = arith.select %65, %67, %cst_20 : f32
    %69 = arith.mulf %56, %68 : f32
    %70 = arith.mulf %60, %68 : f32
    %cst_21 = arith.constant 0.899999976 : f32
    %71 = arith.mulf %cst_21, %69 : f32
    %cst_22 = arith.constant 1.000000e-01 : f32
    %72 = arith.mulf %cst_22, %70 : f32
    %73 = arith.addf %71, %72 : f32
    %c0_23 = arith.constant 0 : index
    %74 = memref.load %arg6[%c0_23] : memref<3xf32, #tpu.memory_space<smem>>
    memref.store %73, %arg6[%c0_23] : memref<3xf32, #tpu.memory_space<smem>>
    %c1 = arith.constant 1 : index
    %75 = memref.load %arg6[%c1] : memref<3xf32, #tpu.memory_space<smem>>
    memref.store %69, %arg6[%c1] : memref<3xf32, #tpu.memory_space<smem>>
    %c2 = arith.constant 2 : index
    %76 = memref.load %arg6[%c2] : memref<3xf32, #tpu.memory_space<smem>>
    memref.store %70, %arg6[%c2] : memref<3xf32, #tpu.memory_space<smem>>
    return
  }
  func.func @transform_0(%arg0: i32) -> (i32, i32) {
    %c0_i32 = arith.constant 0 : i32
    %c0_i32_0 = arith.constant 0 : i32
    %c0_i32_1 = arith.constant 0 : i32
    return %c0_i32, %c0_i32_0 : i32, i32
  }
  func.func @transform_1(%arg0: i32) -> (i32, i32) {
    %c0_i32 = arith.constant 0 : i32
    %c0_i32_0 = arith.constant 0 : i32
    %c0_i32_1 = arith.constant 0 : i32
    return %c0_i32, %c0_i32_0 : i32, i32
  }
  func.func @transform_2(%arg0: i32) -> (i32, i32) {
    %c0_i32 = arith.constant 0 : i32
    %c0_i32_0 = arith.constant 0 : i32
    %c0_i32_1 = arith.constant 0 : i32
    return %c0_i32, %c0_i32_0 : i32, i32
  }
  func.func @transform_3(%arg0: i32) -> (i32, i32) {
    %c0_i32 = arith.constant 0 : i32
    %c0_i32_0 = arith.constant 0 : i32
    %c0_i32_1 = arith.constant 0 : i32
    return %c0_i32, %c0_i32_0 : i32, i32
  }
  func.func @transform_4(%arg0: i32) -> (i32, i32) {
    %c0_i32 = arith.constant 0 : i32
    %c0_i32_0 = arith.constant 0 : i32
    %c0_i32_1 = arith.constant 0 : i32
    return %c0_i32, %c0_i32_0 : i32, i32
  }
  func.func @transform_5(%arg0: i32) -> i32 {
    %c0_i32 = arith.constant 0 : i32
    %c0_i32_0 = arith.constant 0 : i32
    return %c0_i32 : i32
  }
}

</mosaic_0001>

<llo_original>
// kernel: tpu_custom_call.1
$region0: #{tpu_custom_call.1}
  #allocation0 [shape = 'u32[]', space=smem, size = 0x4, offset = 0x4, fixed_abs, tag = 'smem constant byte address 0x4 - core index']
  #allocation1 [shape = 'u32[72,128]{1,0:T(1,128)}', space=vmem, size = 0x9000, scoped, tag = 'internal scratch']
  %s0 = inlined_call_operand.hbm [shape: f32[32,128], index: 0, kind: input, shape index: {}]
  %s1 = inlined_call_operand.hbm [shape: f32[32,128], index: 1, kind: input, shape index: {}]
  %s2 = inlined_call_operand.hbm [shape: f32[32,128], index: 2, kind: input, shape index: {}]
  %s3 = inlined_call_operand.hbm [shape: f32[32,128], index: 3, kind: input, shape index: {}]
  %s4 = inlined_call_operand.hbm [shape: s8[32,128], index: 4, kind: input, shape index: {}]
  %s5 = inlined_call_operand.hbm [shape: f32[3], index: 5, kind: output, shape index: {}]
  %s6 = sld [smem:[#allocation0]]
  $region50: #{tpu_custom_call.1} parent=0
    _
  %s8 = ssub.s32 1, %s6
  %s9 = scalar_select 0, %s8, %s6
  $region1: #{tpu_custom_call.1} parent=0
    #allocation2 [shape = 'u8[16384]{0}', space=vmem, size = 0x4000, scoped, tag = 'input window, operand 0, single buffered']
    #allocation3 [shape = 's32[1]{0}', space=sflag, size = 0x4, scoped, tag = 'scoped memory for tpu_custom_call.1']
    #allocation4 [shape = 's32[1]{0}', space=sflag, size = 0x4, scoped, tag = 'scoped memory for tpu_custom_call.1']
    #allocation5 [shape = 'u8[16384]{0}', space=vmem, size = 0x4000, scoped, tag = 'input window, operand 1, single buffered']
    #allocation6 [shape = 's32[1]{0}', space=sflag, size = 0x4, scoped, tag = 'scoped memory for tpu_custom_call.1']
    #allocation7 [shape = 'u8[16384]{0}', space=vmem, size = 0x4000, scoped, tag = 'input window, operand 2, single buffered']
    #allocation8 [shape = 'u8[16384]{0}', space=vmem, size = 0x4000, scoped, tag = 'input window, operand 3, single buffered']
    #allocation9 [shape = 's32[1]{0}', space=sflag, size = 0x4, scoped, tag = 'scoped memory for tpu_custom_call.1']
    #allocation10 [shape = 'u8[4096]{0}', space=vmem, size = 0x1000, scoped, tag = 'input window, operand 4, single buffered']
    #allocation11 [shape = 'u8[512]{0}', space=smem, size = 0x200, scoped, tag = 'output window, operand 0, single buffered']
    %10 = vsyncpa [#allocation3], 0
    %11 = vsyncpa [#allocation6], 0
    %12 = vsyncpa [#allocation9], 0
    %13 = vsyncpa [#allocation4], 0
    // Predicated region
    $region2: #{tpu_custom_call.1} parent=1 // pred_check
      _
    $region3: #{tpu_custom_call.1} parent=1 // pred_check_branch
      %15 = sbr.rel (0) target = $region5
    $region4: #{tpu_custom_call.1} parent=1 // pred_region
      %17 = vsyncadd [#allocation3], 0
      %s18 = sshll.u32 %s0, 4
      %s19 = int_to_ptr.hbm [resolvable:$true] %s18
      %s20 = sshll.u32 [#allocation2], 4
      %s21 = int_to_ptr.vmem [resolvable:$true] %s20
      %26 = dma.hbm_to_vmem [thread:$0]  %s19, 512, %s21, [#allocation3], 128, 128, 8
    $region5: #{tpu_custom_call.1} parent=1 // pred_fallthru
      _
    // Predicated region
    $region6: #{tpu_custom_call.1} parent=1 // pred_check
      _
    $region7: #{tpu_custom_call.1} parent=1 // pred_check_branch
      %28 = sbr.rel (0) target = $region9
    $region8: #{tpu_custom_call.1} parent=1 // pred_region
      %30 = vsyncadd [#allocation6], 0
      %s31 = sshll.u32 %s1, 4
      %s32 = int_to_ptr.hbm [resolvable:$true] %s31
      %s33 = sshll.u32 [#allocation5], 4
      %s34 = int_to_ptr.vmem [resolvable:$true] %s33
      %39 = dma.hbm_to_vmem [thread:$0]  %s32, 512, %s34, [#allocation6], 128, 128, 8
    $region9: #{tpu_custom_call.1} parent=1 // pred_fallthru
      _
    // Predicated region
    $region10: #{tpu_custom_call.1} parent=1 // pred_check
      _
    $region11: #{tpu_custom_call.1} parent=1 // pred_check_branch
      %41 = sbr.rel (0) target = $region13
    $region12: #{tpu_custom_call.1} parent=1 // pred_region
      %43 = vsyncadd [#allocation6], 0
      %s44 = sshll.u32 %s2, 4
      %s45 = int_to_ptr.hbm [resolvable:$true] %s44
      %s46 = sshll.u32 [#allocation7], 4
      %s47 = int_to_ptr.vmem [resolvable:$true] %s46
      %52 = dma.hbm_to_vmem [thread:$0]  %s45, 512, %s47, [#allocation6], 128, 128, 8
    $region13: #{tpu_custom_call.1} parent=1 // pred_fallthru
      _
    // Predicated region
    $region14: #{tpu_custom_call.1} parent=1 // pred_check
      _
    $region15: #{tpu_custom_call.1} parent=1 // pred_check_branch
      %54 = sbr.rel (0) target = $region17
    $region16: #{tpu_custom_call.1} parent=1 // pred_region
      %56 = vsyncadd [#allocation9], 0
      %s57 = sshll.u32 %s3, 4
      %s58 = int_to_ptr.hbm [resolvable:$true] %s57
      %s59 = sshll.u32 [#allocation8], 4
      %s60 = int_to_ptr.vmem [resolvable:$true] %s59
      %65 = dma.hbm_to_vmem [thread:$0]  %s58, 512, %s60, [#allocation9], 128, 128, 8
    $region17: #{tpu_custom_call.1} parent=1 // pred_fallthru
      _
    // Predicated region
    $region18: #{tpu_custom_call.1} parent=1 // pred_check
      _
    $region19: #{tpu_custom_call.1} parent=1 // pred_check_branch
      %67 = sbr.rel (0) target = $region21
    $region20: #{tpu_custom_call.1} parent=1 // pred_region
      %69 = vsyncadd [#allocation9], 0
      %s71 = sshll.u32 %s4, 4
      %s72 = int_to_ptr.hbm [resolvable:$true] %s71
      %s73 = sshll.u32 [#allocation10], 4
      %s74 = int_to_ptr.vmem [resolvable:$true] %s73
      %76 = dma.hbm_to_vmem [thread:$0]  %s72, 128, %s74, [#allocation9]
    $region21: #{tpu_custom_call.1} parent=1 // pred_fallthru
      _
    // Predicated region
    $region22: #{tpu_custom_call.1} parent=1 // pred_check
      _
    $region23: #{tpu_custom_call.1} parent=1 // pred_check_branch
      %78 = sbr.rel (0) target = $region25
    $region24: #{tpu_custom_call.1} parent=1 // pred_region
      %80 = dma.done [#allocation3], 512
    $region25: #{tpu_custom_call.1} parent=1 // pred_fallthru
      _
    // Predicated region
    $region26: #{tpu_custom_call.1} parent=1 // pred_check
      _
    $region27: #{tpu_custom_call.1} parent=1 // pred_check_branch
      %82 = sbr.rel (0) target = $region29
    $region28: #{tpu_custom_call.1} parent=1 // pred_region
      %84 = dma.done [#allocation6], 512
    $region29: #{tpu_custom_call.1} parent=1 // pred_fallthru
      _
    // Predicated region
    $region30: #{tpu_custom_call.1} parent=1 // pred_check
      _
    $region31: #{tpu_custom_call.1} parent=1 // pred_check_branch
      %86 = sbr.rel (0) target = $region33
    $region32: #{tpu_custom_call.1} parent=1 // pred_region
      %88 = dma.done [#allocation6], 512
    $region33: #{tpu_custom_call.1} parent=1 // pred_fallthru
      _
    // Predicated region
    $region34: #{tpu_custom_call.1} parent=1 // pred_check
      _
    $region35: #{tpu_custom_call.1} parent=1 // pred_check_branch
      %90 = sbr.rel (0) target = $region37
    $region36: #{tpu_custom_call.1} parent=1 // pred_region
      %92 = dma.done [#allocation9], 512
    $region37: #{tpu_custom_call.1} parent=1 // pred_fallthru
      _
    // Predicated region
    $region38: #{tpu_custom_call.1} parent=1 // pred_check
      _
    $region39: #{tpu_custom_call.1} parent=1 // pred_check_branch
      %94 = sbr.rel (0) target = $region41
    $region40: #{tpu_custom_call.1} parent=1 // pred_region
      %96 = dma.done [#allocation9], 128
    $region41: #{tpu_custom_call.1} parent=1 // pred_fallthru
      _
    %v99 = vld [vmem:[#allocation10] sm:$0xff]
    %vm100 = vnez %v99
    %v101 = vld [vmem:[#allocation2] sm:$0xff]
    %v102 = vld [vmem:[#allocation2 + $0x8] sm:$0xff]
    %v103 = vld [vmem:[#allocation2 + $0x10] sm:$0xff]
    %v104 = vld [vmem:[#allocation2 + $0x18] sm:$0xff]
    %v105 = vld [vmem:[#allocation5] sm:$0xff]
    %v106 = vld [vmem:[#allocation5 + $0x8] sm:$0xff]
    %v107 = vld [vmem:[#allocation5 + $0x10] sm:$0xff]
    %v108 = vld [vmem:[#allocation5 + $0x18] sm:$0xff]
    %v109 = vsub.f32 %v101, %v105
    %v110 = vsub.f32 %v102, %v106
    %v111 = vsub.f32 %v103, %v107
    %v112 = vsub.f32 %v104, %v108
    %v113 = vand.u32 2147483647, %v109
    %v114 = vand.u32 2147483647, %v110
    %v115 = vand.u32 2147483647, %v111
    %v116 = vand.u32 2147483647, %v112
    %vm117 = vcmp.lt.f32.partialorder %v113, 1.0
    %vm118 = vcmp.lt.f32.partialorder %v114, 1.0
    %vm119 = vcmp.lt.f32.partialorder %v115, 1.0
    %vm120 = vcmp.lt.f32.partialorder %v116, 1.0
    %v121 = vmul.f32 %v109, 0.5
    %v122 = vmul.f32 %v110, 0.5
    %v123 = vmul.f32 %v111, 0.5
    %v124 = vmul.f32 %v112, 0.5
    %v125 = vmul.f32 %v121, %v109
    %v126 = vmul.f32 %v122, %v110
    %v127 = vmul.f32 %v123, %v111
    %v128 = vmul.f32 %v124, %v112
    %v129 = vsub.f32 %v113, 0.5
    %v130 = vsub.f32 %v114, 0.5
    %v131 = vsub.f32 %v115, 0.5
    %v132 = vsub.f32 %v116, 0.5
    %v133 = vsel %vm117, %v125, %v129
    %v134 = vsel %vm118, %v126, %v130
    %v135 = vsel %vm119, %v127, %v131
    %v136 = vsel %vm120, %v128, %v132
    %v137 = vld [vmem:[#allocation7] sm:$0xff]
    %v138 = vld [vmem:[#allocation7 + $0x8] sm:$0xff]
    %v139 = vld [vmem:[#allocation7 + $0x10] sm:$0xff]
    %v140 = vld [vmem:[#allocation7 + $0x18] sm:$0xff]
    %v141 = vld [vmem:[#allocation8] sm:$0xff]
    %v142 = vld [vmem:[#allocation8 + $0x8] sm:$0xff]
    %v143 = vld [vmem:[#allocation8 + $0x10] sm:$0xff]
    %v144 = vld [vmem:[#allocation8 + $0x18] sm:$0xff]
    %v145 = vmax.f32 %v137, 0.0
    %v146 = vmax.f32 %v138, 0.0
    %v147 = vmax.f32 %v139, 0.0
    %v148 = vmax.f32 %v140, 0.0
    %v149 = vmul.f32 %v137, %v141
    %v150 = vmul.f32 %v138, %v142
    %v151 = vmul.f32 %v139, %v143
    %v152 = vmul.f32 %v140, %v144
    %v153 = vsub.f32 %v145, %v149
    %v154 = vsub.f32 %v146, %v150
    %v155 = vsub.f32 %v147, %v151
    %v156 = vsub.f32 %v148, %v152
    %v157 = vand.u32 2147483647, %v137
    %v158 = vand.u32 2147483647, %v138
    %v159 = vand.u32 2147483647, %v139
    %v160 = vand.u32 2147483647, %v140
    %v161 = vsub.f32 0.0, %v157
    %v162 = vsub.f32 0.0, %v158
    %v163 = vsub.f32 0.0, %v159
    %v164 = vsub.f32 0.0, %v160
    %v165 = vmul.f32 %v161, 1.442695
    %v166 = vpow.pop %v165
    %v167 = vmul.f32 %v162, 1.442695
    %v168 = vpow.pop %v167
    %v169 = vmul.f32 %v163, 1.442695
    %v170 = vpow.pop %v169
    %v171 = vmul.f32 %v164, 1.442695
    %v172 = vpow.pop %v171
    %v173 = vadd.f32 %v166, 1.0
    %v174 = vlog2.pop %v173
    %v175 = vmul.f32 %v174, 0.6931472
    %v176 = vmul.f32 -0.5, %v166
    %v177 = vadd.f32 %v176, 1.0
    %v178 = vmul.f32 %v177, %v166
    %v179 = vand.u32 2147483647, %v166
    %vm180 = vcmp.lt.f32.partialorder %v179, 0.0004427343
    %v181 = vsel %vm180, %v178, %v175
    %v182 = vadd.f32 %v168, 1.0
    %v183 = vlog2.pop %v182
    %v184 = vmul.f32 %v183, 0.6931472
    %v185 = vmul.f32 -0.5, %v168
    %v186 = vadd.f32 %v185, 1.0
    %v187 = vmul.f32 %v186, %v168
    %v188 = vand.u32 2147483647, %v168
    %vm189 = vcmp.lt.f32.partialorder %v188, 0.0004427343
    %v190 = vsel %vm189, %v187, %v184
    %v191 = vadd.f32 %v170, 1.0
    %v192 = vlog2.pop %v191
    %v193 = vmul.f32 %v192, 0.6931472
    %v194 = vmul.f32 -0.5, %v170
    %v195 = vadd.f32 %v194, 1.0
    %v196 = vmul.f32 %v195, %v170
    %v197 = vand.u32 2147483647, %v170
    %vm198 = vcmp.lt.f32.partialorder %v197, 0.0004427343
    %v199 = vsel %vm198, %v196, %v193
    %v200 = vadd.f32 %v172, 1.0
    %v201 = vlog2.pop %v200
    %v202 = vmul.f32 %v201, 0.6931472
    %v203 = vmul.f32 -0.5, %v172
    %v204 = vadd.f32 %v203, 1.0
    %v205 = vmul.f32 %v204, %v172
    %v206 = vand.u32 2147483647, %v172
    %vm207 = vcmp.lt.f32.partialorder %v206, 0.0004427343
    %v208 = vsel %vm207, %v205, %v202
    %v209 = vadd.f32 %v153, %v181
    %v210 = vadd.f32 %v154, %v190
    %v211 = vadd.f32 %v155, %v199
    %v212 = vadd.f32 %v156, %v208
    %v213 = vsel %vm100, 16843009, 0
    %v214 = vunpack.c.0.s8 %v213
    %v215 = vunpack.c.1.s8 %v213
    %v216 = vunpack.c.2.s8 %v213
    %v217 = vunpack.c.3.s8 %v213
    %v218 = vpack.c.b16 %v214, %v214
    %v219 = vpack.c.b8 %v218, %v218
    %v220 = vpack.c.b16 %v215, %v215
    %v221 = vpack.c.b8 %v220, %v220
    %v222 = vpack.c.b16 %v216, %v216
    %v223 = vpack.c.b8 %v222, %v222
    %v224 = vpack.c.b16 %v217, %v217
    %v225 = vpack.c.b8 %v224, %v224
    %vm226 = vnez %v219
    %vm227 = vnez %v221
    %vm228 = vnez %v223
    %vm229 = vnez %v225
    %v230 = vsel %vm226, 16843009, 0
    %v231 = vsel %vm227, 16843009, 0
    %v232 = vsel %vm228, 16843009, 0
    %v233 = vsel %vm229, 16843009, 0
    %v234 = vunpack.c.0.s8 %v230
    %v235 = vunpack.c.0.s8 %v231
    %v236 = vunpack.c.0.s8 %v232
    %v237 = vunpack.c.0.s8 %v233
    %vm238 = vcmp.ne.s32.totalorder %v234, 0
    %vm239 = vcmp.ne.s32.totalorder %v235, 0
    %vm240 = vcmp.ne.s32.totalorder %v236, 0
    %vm241 = vcmp.ne.s32.totalorder %v237, 0
    %v242 = vsel %vm238, %v133, 0.0
    %v243 = vsel %vm239, %v134, 0.0
    %v244 = vsel %vm240, %v135, 0.0
    %v245 = vsel %vm241, %v136, 0.0
    %v246 = vadd.f32 %v242, %v243
    %v247 = vadd.f32 %v246, %v244
    %v248 = vadd.f32 %v247, %v245
    %v249 = vsel %vm238, %v209, 0.0
    %v250 = vsel %vm239, %v210, 0.0
    %v251 = vsel %vm240, %v211, 0.0
    %v252 = vsel %vm241, %v212, 0.0
    %v253 = vadd.f32 %v249, %v250
    %v254 = vadd.f32 %v253, %v251
    %v255 = vadd.f32 %v254, %v252
    %v256 = vsel %vm238, 1, 0
    %v257 = vsel %vm239, 1, 0
    %v258 = vsel %vm240, 1, 0
    %v259 = vsel %vm241, 1, 0
    %v260 = vcvt.s32.f32 %v256
    %v261 = vcvt.s32.f32 %v257
    %v262 = vcvt.s32.f32 %v258
    %v263 = vcvt.s32.f32 %v259
    %v264 = vadd.f32 %v260, %v261
    %v265 = vadd.f32 %v264, %v262
    %v266 = vadd.f32 %v265, %v263
    %267 = vadd.xlane.f32.xlu0 %v248
    %v268 = vpop.xlane.xlu0 %267
    %v269 = vrot.slane %v268, 4
    %v270 = vadd.f32 %v268, %v269
    %v271 = vrot.slane %v270, 2
    %v272 = vadd.f32 %v270, %v271
    %v273 = vrot.slane %v272, 1
    %v274 = vadd.f32 %v272, %v273
    %s275 = vtos %v274
    %276 = vadd.xlane.f32.xlu0 %v255
    %v277 = vpop.xlane.xlu0 %276
    %v278 = vrot.slane %v277, 4
    %v279 = vadd.f32 %v277, %v278
    %v280 = vrot.slane %v279, 2
    %v281 = vadd.f32 %v279, %v280
    %v282 = vrot.slane %v281, 1
    %v283 = vadd.f32 %v281, %v282
    %s284 = vtos %v283
    %285 = vadd.xlane.f32.xlu0 %v266
    %v286 = vpop.xlane.xlu0 %285
    %v287 = vrot.slane %v286, 4
    %v288 = vadd.f32 %v286, %v287
    %v289 = vrot.slane %v288, 2
    %v290 = vadd.f32 %v288, %v289
    %v291 = vrot.slane %v290, 1
    %v292 = vadd.f32 %v290, %v291
    %s293 = vtos %v292
    %p294 = scmp.gt.f32.partialorder %s293, 0.0
    %s295 = smax.f32 %s293, 1.0
    %v296 = vstv %s295
    %v297 = vrcp.pop %v296
    %v298 = vmul.f32 %v296, %v297
    %v299 = vsub.f32 1.0, %v298
    %v300 = vmul.f32 %v297, %v299
    %v301 = vadd.f32 %v297, %v300
    %vm302 = vweird.f32 %v296
    %vm303 = vweird.f32 %v297
    %vm304 = vmor %vm302, %vm303
    %v305 = vsel %vm304, %v297, %v301
    %v306 = vand.u32 2147483647, %v296
    %vm307 = vcmp.eq.f32.partialorder %v306, 8.507059e+37
    %v308 = vand.u32 %v296, 2147483648
    %v309 = vor.u32 1.1754944e-38, %v308
    %v310 = vsel %vm307, %v309, %v305
    %s311 = vtos %v310
    %s312 = scalar_select %p294, %s311, 0.0
    %s313 = smul.f32 %s275, %s312
    %s314 = smul.f32 %s284, %s312
    %s315 = smul.f32 %s313, 0.9
    %s316 = smul.f32 %s314, 0.1
    %s317 = sadd.f32 %s315, %s316
    %s318 = scalar_lea.smem [#allocation11], 0
    %319 = sst [smem:[%s318]] %s317
    %s320 = scalar_lea.smem [#allocation11], 1
    %321 = sst [smem:[%s320]] %s313
    %s322 = scalar_lea.smem [#allocation11], 2
    %323 = sst [smem:[%s322]] %s314
    // Predicated region
    $region42: #{tpu_custom_call.1} parent=1 // pred_check
      _
    $region43: #{tpu_custom_call.1} parent=1 // pred_check_branch
      %325 = sbr.rel (0) target = $region45
    $region44: #{tpu_custom_call.1} parent=1 // pred_region
      %327 = vsyncadd [#allocation4], 0
      %s329 = sshll.u32 %s5, 4
      %s330 = int_to_ptr.hbm [resolvable:$true] %s329
      %332 = dma.smem_to_hbm [#allocation11], 16, %s330, [#allocation4]
    $region45: #{tpu_custom_call.1} parent=1 // pred_fallthru
      _
    // Predicated region
    $region46: #{tpu_custom_call.1} parent=1 // pred_check
      _
    $region47: #{tpu_custom_call.1} parent=1 // pred_check_branch
      %334 = sbr.rel (0) target = $region49
    $region48: #{tpu_custom_call.1} parent=1 // pred_region
      %336 = dma.done [#allocation4], 16
    $region49: #{tpu_custom_call.1} parent=1 // pred_fallthru
      _
    %337 = sfence
    %338 = vsyncpa [#allocation3], 1
    %339 = vsyncpa [#allocation6], 1
    %340 = vsyncpa [#allocation9], 1
    %341 = vsyncpa [#allocation4], 1

</llo_original>
